<compile_context>
chip_gen: v7x
topology: tpu7x:2x2x1
jax: 0.10.0
libtpu: 0.0.40
codegen_flags: <defaults>
</compile_context>

<pallas_src>
import math

import jax
import jax.numpy as jnp
from jax.experimental import pallas as pl
from jax.experimental.pallas import tpu as pltpu


def fft_encoding_kernel(feats_ref, params_ref, o_ref):
    # feats_ref  : (TN, 2)  columns = (amplitude, phase) for this tile of rows
    # params_ref : (8, Hp)  row 0 = W[:,0], row 1 = W[:,1], row 2 = bias
    # o_ref      : (TN, Hp) output tile (lane-dense, Hp % 128 == 0)
    feats = feats_ref[...].astype(jnp.float32)        # (TN, 2)
    amp = feats[:, 0:1]                               # (TN, 1)
    ph = feats[:, 1:2]                                # (TN, 1)

    w_amp = params_ref[0:1, :].astype(jnp.float32)    # (1, Hp)
    w_ph = params_ref[1:2, :].astype(jnp.float32)     # (1, Hp)
    b = params_ref[2:3, :].astype(jnp.float32)        # (1, Hp)

    # Linear(2, H): out[n, h] = amp[n]*W[h,0] + phase[n]*W[h,1] + b[h]
    # Two broadcast multiply-adds on the VPU; no MXU padding for K=2.
    out = amp * w_amp + ph * w_ph + b                 # (TN, Hp)
    o_ref[...] = out.astype(o_ref.dtype)


def pack_fft_encoding_params(weight, bias):
    """Pack nn.Linear(2, H) params into one padded (8, Hp) slab (build ONCE)."""
    H, two = weight.shape
    assert two == 2
    Hp = pl.cdiv(H, 128) * 128
    slab = jnp.zeros((8, Hp), jnp.float32)
    slab = slab.at[0, :H].set(weight[:, 0].astype(jnp.float32))
    slab = slab.at[1, :H].set(weight[:, 1].astype(jnp.float32))
    slab = slab.at[2, :H].set(bias.astype(jnp.float32))
    return slab, H


def _choose_tile_n(n, hp, *, vmem_budget_bytes=8 * 1024 * 1024):
    """Row-tile size from a VMEM budget (double-buffered out + feats)."""
    bytes_per_row = 2 * 4 * (hp + 2)          # 2 buffers * f32 * (out + feats) row
    tn = vmem_budget_bytes // bytes_per_row   # ~1-4 MiB output blocks
    tn = int(max(512, min(tn, 8192)))
    # Keep >= 2 grid steps when the problem allows it (v7x: 2 TCs share the grid).
    two_step = pl.cdiv(pl.cdiv(n, 2), 8) * 8
    tn = min(tn, max(8, two_step))
    return max(8, (tn // 8) * 8)


def fft_encoding_packed(x, params_slab, hidden_dim, *, tile_n=None,
                        out_dtype=jnp.float32):
    """FFTEncoding forward with pre-packed parameter slab.

    x           : (N,)  real signal
    params_slab : (8, Hp) from pack_fft_encoding_params
    returns (N, hidden_dim) in out_dtype (f32 default; bf16 halves store bytes
    if the consumer tolerates it).
    """
    x = jnp.asarray(x, jnp.float32)
    assert x.ndim == 1, "FFTEncoding expects a 1-D input signal"
    n = x.shape[0]
    hp = params_slab.shape[1]

    # TODO(synk): torch.fft.fft / torch.angle (complex64 FFT, atan2) have no
    # Pallas TPU lowering; computed with XLA ops here and fed as one (N, 2) array.
    X = jnp.fft.fft(x)
    feats = jnp.stack(
        [jnp.abs(X).astype(jnp.float32), jnp.angle(X).astype(jnp.float32)],
        axis=-1)                                                  # (N, 2)

    tn = _choose_tile_n(n, hp) if tile_n is None else max(8, (int(tile_n) // 8) * 8)
    grid = (pl.cdiv(n, tn),)   # ragged last block handled by Pallas masking

    out = pl.pallas_call(
        fft_encoding_kernel,
        out_shape=jax.ShapeDtypeStruct((n, hp), out_dtype),
        grid_spec=pltpu.PrefetchScalarGridSpec(
            num_scalar_prefetch=0,
            grid=grid,
            in_specs=[
                pl.BlockSpec((tn, 2), lambda i: (i, 0)),    # (amp, phase) columns
                pl.BlockSpec((8, hp), lambda i: (0, 0)),    # packed W/bias slab
            ],
            out_specs=pl.BlockSpec((tn, hp), lambda i: (i, 0)),
        ),
        compiler_params=pltpu.CompilerParams(
            dimension_semantics=("parallel",)),
    )(feats, params_slab)

    if hp != hidden_dim:                      # only when H is not a multiple of 128
        out = out[:, :hidden_dim]
    return out


def fft_encoding(x, weight, bias, **kwargs):
    """Convenience wrapper: packs params on the fly (prefer the packed path)."""
    params_slab, h = pack_fft_encoding_params(weight, bias)
    return fft_encoding_packed(x, params_slab, h, **kwargs)


def fft_encoding_ref(x, weight, bias):
    X = jnp.fft.fft(x)
    feats = jnp.stack([jnp.abs(X), jnp.angle(X)], axis=-1)   # (N, 2)
    return (jnp.dot(feats, weight.T.astype(jnp.float32),
                    precision=jax.lax.Precision.HIGHEST)
            + bias.astype(jnp.float32))


if __name__ == "__main__":
    key = jax.random.PRNGKey(0)
    N, hidden_dim = 1024, 128                 # 1-D signal, module default hidden

    kx, kw, kb = jax.random.split(key, 3)
    x = jax.random.normal(kx, (N,), dtype=jnp.float32)

    # nn.Linear(2, hidden_dim) default init: U(-1/sqrt(fan_in), 1/sqrt(fan_in))
    bound = 1.0 / math.sqrt(2.0)
    weight = jax.random.uniform(kw, (hidden_dim, 2), jnp.float32, -bound, bound)
    bias = jax.random.uniform(kb, (hidden_dim,), jnp.float32, -bound, bound)

    # Parameter slab built once (hoisted out of the per-call path).
    params_slab, H = pack_fft_encoding_params(weight, bias)
    fwd = jax.jit(lambda sig: fft_encoding_packed(sig, params_slab, H))

    out = jax.block_until_ready(fwd(x))       # N=1024 -> tile_n=512 -> 2 parallel steps

    ref = fft_encoding_ref(x, weight, bias)
    assert out.shape == (N, hidden_dim)
    assert jnp.allclose(out, ref, atol=1e-4, rtol=1e-4), "mismatch vs reference"

    print("KERNEL_OK")
</pallas_src>

<mosaic_0001>
module attributes {stable_mosaic.version = 11 : i64} {
  func.func @fft_encoding_kernel(%arg0: i32, %arg1: memref<512x2xf32, #tpu.memory_space<vmem>>, %arg2: memref<8x128xf32, #tpu.memory_space<vmem>>, %arg3: memref<512x128xf32, #tpu.memory_space<vmem>>) attributes {dimension_semantics = [#tpu.dimension_semantics<parallel>], iteration_bounds = array<i64: 2>, scalar_prefetch = 0 : i64, scratch_operands = 0 : i64, tpu.core_type = #tpu.core_type<tc>, window_params = [{transform_indices = @transform_0, window_bounds = array<i64: 512, 2>}, {pipeline_mode = #tpu.pipeline_mode<synchronous>, transform_indices = @transform_1, window_bounds = array<i64: 8, 128>}, {transform_indices = @transform_2, window_bounds = array<i64: 512, 128>}]} {
    %c0 = arith.constant 0 : index
    %c0_0 = arith.constant 0 : index
    %0 = vector.load %arg1[%c0, %c0_0] : memref<512x2xf32, #tpu.memory_space<vmem>>, vector<512x2xf32>
    %1 = vector.extract_strided_slice %0 {offsets = [0, 0], sizes = [512, 1], strides = [1, 1]} : vector<512x2xf32> to vector<512x1xf32>
    %2 = vector.extract_strided_slice %0 {offsets = [0, 1], sizes = [512, 1], strides = [1, 1]} : vector<512x2xf32> to vector<512x1xf32>
    %c0_1 = arith.constant 0 : index
    %c0_2 = arith.constant 0 : index
    %3 = vector.load %arg2[%c0_1, %c0_2] : memref<8x128xf32, #tpu.memory_space<vmem>>, vector<1x128xf32>
    %c1 = arith.constant 1 : index
    %c0_3 = arith.constant 0 : index
    %4 = vector.load %arg2[%c1, %c0_3] : memref<8x128xf32, #tpu.memory_space<vmem>>, vector<1x128xf32>
    %c2 = arith.constant 2 : index
    %c0_4 = arith.constant 0 : index
    %5 = vector.load %arg2[%c2, %c0_4] : memref<8x128xf32, #tpu.memory_space<vmem>>, vector<1x128xf32>
    %6 = vector.broadcast %1 : vector<512x1xf32> to vector<512x128xf32>
    %7 = vector.broadcast %3 : vector<1x128xf32> to vector<512x128xf32>
    %8 = arith.mulf %6, %7 : vector<512x128xf32>
    %9 = vector.broadcast %2 : vector<512x1xf32> to vector<512x128xf32>
    %10 = vector.broadcast %4 : vector<1x128xf32> to vector<512x128xf32>
    %11 = arith.mulf %9, %10 : vector<512x128xf32>
    %12 = arith.addf %8, %11 : vector<512x128xf32>
    %13 = vector.broadcast %5 : vector<1x128xf32> to vector<512x128xf32>
    %14 = arith.addf %12, %13 : vector<512x128xf32>
    %c0_5 = arith.constant 0 : index
    %c0_6 = arith.constant 0 : index
    %15 = vector.load %arg3[%c0_5, %c0_6] : memref<512x128xf32, #tpu.memory_space<vmem>>, vector<512x128xf32>
    tpu.vector_store %arg3[%c0_5, %c0_6], %14 {strides = array<i32>} : memref<512x128xf32, #tpu.memory_space<vmem>>, vector<512x128xf32>,
    return
  }
  func.func @transform_0(%arg0: i32) -> (i32, i32) {
    %c0_i32 = arith.constant 0 : i32
    %c0_i32_0 = arith.constant 0 : i32
    return %arg0, %c0_i32 : i32, i32
  }
  func.func @transform_1(%arg0: i32) -> (i32, i32) {
    %c0_i32 = arith.constant 0 : i32
    %c0_i32_0 = arith.constant 0 : i32
    %c0_i32_1 = arith.constant 0 : i32
    return %c0_i32, %c0_i32_0 : i32, i32
  }
  func.func @transform_2(%arg0: i32) -> (i32, i32) {
    %c0_i32 = arith.constant 0 : i32
    %c0_i32_0 = arith.constant 0 : i32
    return %arg0, %c0_i32 : i32, i32
  }
}

</mosaic_0001>

<llo_original>
// kernel: _lambda_.1
$region0: #{_lambda_.1}
  #allocation0 [shape = 'u32[]', space=smem, size = 0x4, offset = 0x4, fixed_abs, tag = 'smem constant byte address 0x4 - core index']
  #allocation1 [shape = 'u32[144,128]{1,0:T(1,128)}', space=vmem, size = 0x12000, scoped, tag = 'internal scratch']
  %s0 = inlined_call_operand.vmem [shape: f32[1024,2], index: 0, kind: input, shape index: {}]
  %s1 = inlined_call_operand.vmem [shape: f32[8,128], index: 1, kind: input, shape index: {}]
  %s2 = inlined_call_operand.hbm [shape: f32[1024,128], index: 2, kind: output, shape index: {}]
  %s3 = sld [smem:[#allocation0]]
  $region41: #{_lambda_.1} parent=0
    _
  %s5 = ssub.s32 1, %s3
  %s6 = scalar_select 0, %s5, %s3
  $region1: #{_lambda_.1} parent=0
    #allocation2 [shape = 'u8[524288]{0}', space=vmem, size = 0x80000, scoped, tag = 'output window, operand 0']
    #allocation3 [shape = 's32[2]{0}', space=sflag, size = 0x8, scoped, tag = 'scoped memory for _lambda_.1']
    %7 = vsyncpa [#allocation3], 0
    %s8 = scalar_lea.sflag [#allocation3], 1
    %9 = vsyncpa %s8, 0
    loop: start=0, step=1, limit=4
    $region2: #{_lambda_.1} parent=1 // loop_pre_header
      _
    $region3: #{_lambda_.1} parent=1 // loop_header
      %s11 = sphi 0, %s15
      %p12 = scmp.ge.s32.totalorder %s11, 4
      %s21 = sphi 0, %s23
      %s24 = sphi 0, %s21
      %s25 = sphi 0, %s24
      %s41 = sphi 0, %s25
      %s45 = sphi 0, %s45
      %s47 = sphi 0, %s45
      %s48 = sphi 0, %s47
      %s62 = sphi 0, %s48
      %s68 = sphi 0, %s70
      %s71 = sphi 0, %s68
      %s72 = sphi 0, %s71
      %s88 = sphi 0, %s72
    $region4: #{_lambda_.1} parent=1 // loop_header_branch
      %14 = sbr.rel (%p12) target = $region8
    $region5: #{_lambda_.1} parent=1 // loop_body
      %s16 = ssub.s32 %s11, 1
      %s17 = ssub.s32 %s11, 2
      %s18 = sadd.s32 %s11, 1
      %s19 = ssub.s32 %s11, %s18
      %p20 = scmp.eq.s32.totalorder %s19, 0
      %s22 = sadd.s32 %s21, 1
      %s23 = scalar_select %p20, %s21, %s22
      %p26 = pneg %p20
      %p27 = scmp.eq.s32.totalorder %s11, 1
      %p28 = por %p26, %p27
      %p29 = scmp.ne.s32.totalorder %s21, %s24
      %p30 = scmp.eq.s32.totalorder %s11, 0
      %p31 = por %p29, %p30
      %p32 = scmp.ne.s32.totalorder %s21, %s24
      %p33 = scmp.eq.s32.totalorder %s16, 1
      %p34 = por %p32, %p33
      %p35 = scmp.ne.s32.totalorder %s24, %s25
      %p36 = scmp.eq.s32.totalorder %s16, 0
      %p37 = por %p35, %p36
      %p38 = scmp.ne.s32.totalorder %s24, %s25
      %p39 = scmp.eq.s32.totalorder %s17, 1
      %p40 = por %p38, %p39
      %p42 = scmp.ne.s32.totalorder %s25, %s41
      %p43 = scmp.eq.s32.totalorder %s17, 0
      %p44 = por %p42, %p43
      %s46 = sadd.s32 %s45, 1
      %p49 = scmp.eq.s32.totalorder %s11, 1
      %p50 = scmp.ne.s32.totalorder %s45, %s47
      %p51 = scmp.eq.s32.totalorder %s11, 0
      %p52 = por %p50, %p51
      %p53 = scmp.ne.s32.totalorder %s45, %s47
      %p54 = scmp.eq.s32.totalorder %s16, 1
      %p55 = por %p53, %p54
      %p56 = scmp.ne.s32.totalorder %s47, %s48
      %p57 = scmp.eq.s32.totalorder %s16, 0
      %p58 = por %p56, %p57
      %p59 = scmp.ne.s32.totalorder %s47, %s48
      %p60 = scmp.eq.s32.totalorder %s17, 1
      %p61 = por %p59, %p60
      %p63 = scmp.ne.s32.totalorder %s48, %s62
      %p64 = scmp.eq.s32.totalorder %s17, 0
      %p65 = por %p63, %p64
      %s66 = ssub.s32 %s11, %s18
      %p67 = scmp.eq.s32.totalorder %s66, 0
      %s69 = sadd.s32 %s68, 1
      %s70 = scalar_select %p67, %s68, %s69
      %p73 = pneg %p67
      %p74 = scmp.eq.s32.totalorder %s11, 1
      %p75 = por %p73, %p74
      %p76 = scmp.ne.s32.totalorder %s68, %s71
      %p77 = scmp.eq.s32.totalorder %s11, 0
      %p78 = por %p76, %p77
      %p79 = scmp.ne.s32.totalorder %s68, %s71
      %p80 = scmp.eq.s32.totalorder %s16, 1
      %p81 = por %p79, %p80
      %p82 = scmp.ne.s32.totalorder %s71, %s72
      %p83 = scmp.eq.s32.totalorder %s16, 0
      %p84 = por %p82, %p83
      %p85 = scmp.ne.s32.totalorder %s71, %s72
      %p86 = scmp.eq.s32.totalorder %s17, 1
      %p87 = por %p85, %p86
      %p89 = scmp.ne.s32.totalorder %s72, %s88
      %p90 = scmp.eq.s32.totalorder %s17, 0
      %p91 = por %p89, %p90
      %p92 = scmp.le.s32.totalorder 1, %s11
      %p93 = scmp.lt.s32.totalorder %s11, 3
      %p94 = pnand %p92, %p93
      %p95 = pneg %p94
      // Predicated region
      $region9: #{_lambda_.1} parent=5 // pred_check
        _
      $region10: #{_lambda_.1} parent=5 // pred_check_branch
        %97 = sbr.rel (%p94) target = $region12
      $region11: #{_lambda_.1} parent=5 // pred_region
        %s98 = ssub.s32 %s11, 1
        // Predicated region
        $region13: #{_lambda_.1} parent=11 // pred_check
          %p99 = pneg %p58
        $region14: #{_lambda_.1} parent=11 // pred_check_branch
          %101 = sbr.rel (%p99) target = $region16
        $region15: #{_lambda_.1} parent=11 // pred_region
          _
        $region16: #{_lambda_.1} parent=11 // pred_fallthru
          _
      $region12: #{_lambda_.1} parent=5 // pred_fallthru
        _
      %p102 = scmp.lt.s32.totalorder %s11, 2
      // Predicated region
      $region17: #{_lambda_.1} parent=5 // pred_check
        %p103 = pneg %p102
      $region18: #{_lambda_.1} parent=5 // pred_check_branch
        %105 = sbr.rel (%p103) target = $region20
      $region19: #{_lambda_.1} parent=5 // pred_region
        // Predicated region
        $region21: #{_lambda_.1} parent=19 // pred_check
          %p106 = pneg %p31
        $region22: #{_lambda_.1} parent=19 // pred_check_branch
          %108 = sbr.rel (%p106) target = $region24
        $region23: #{_lambda_.1} parent=19 // pred_region
          %s109 = smul.u32 64, %s11
          %p110 = scmp.lt.s32.totalorder %s109, 127
          %s111 = scalar_select %p110, %s109, 127
          %s112 = smul.addr %s111, 8
          %s113 = scalar_lea.vmem %s0, %s112
          %s114 = smul.u32 64, %s11
        $region24: #{_lambda_.1} parent=19 // pred_fallthru
          _
      $region20: #{_lambda_.1} parent=5 // pred_fallthru
        _
      %p115 = scmp.le.s32.totalorder 1, %s11
      %p116 = scmp.lt.s32.totalorder %s11, 3
      %p117 = pnand %p115, %p116
      %p118 = pneg %p117
      // Predicated region
      $region25: #{_lambda_.1} parent=5 // pred_check
        _
      $region26: #{_lambda_.1} parent=5 // pred_check_branch
        %120 = sbr.rel (%p117) target = $region28
      $region27: #{_lambda_.1} parent=5 // pred_region
        %s121 = ssub.s32 %s11, 1
        %s122 = smul.u32 64, %s16
        %p123 = scmp.lt.s32.totalorder %s122, 127
        %s124 = scalar_select %p123, %s122, 127
        %s125 = smul.addr %s124, 8
        %s126 = scalar_lea.vmem %s0, %s125
        %p127 = pneg %p37
        %p128 = pneg %p34
        %p129 = pneg %p58
        %p130 = pneg %p55
        %p131 = pneg %p84
        %p132 = pneg %p81
        %s133 = sand.u32 %s71, 1
        %s134 = scalar_lea.sflag [#allocation3], %s133
        %s135 = sand.u32 %s71, 1
        %s136 = smul.addr %s135, 512
        %s137 = scalar_lea.vmem [#allocation2], %s136
        %s138 = smul.u32 64, %s16
        %p139 = scmp.lt.s32.totalorder %s138, 127
        %s140 = scalar_select %p139, %s138, 127
        %s141 = smul.addr %s140, 8
        %s142 = scalar_lea.vmem %s0, %s141
        %s143 = smul.u32 64, %s16
        %s144 = smul.u32 64, %s16
        %v145 = vld [vmem:[%s142] sm:$0xff]
        %v146 = vld [vmem:[%s142 + $0x8] sm:$0xff]
        %v147 = vld [vmem:[%s142 + $0x10] sm:$0xff]
        %v148 = vld [vmem:[%s142 + $0x18] sm:$0xff]
        %v149 = vld [vmem:[%s142 + $0x20] sm:$0xff]
        %v150 = vld [vmem:[%s142 + $0x28] sm:$0xff]
        %v151 = vld [vmem:[%s142 + $0x30] sm:$0xff]
        %v152 = vld [vmem:[%s142 + $0x38] sm:$0xff]
        %v153 = vld [vmem:[%s142 + $0x40] sm:$0xff]
        %v154 = vld [vmem:[%s142 + $0x48] sm:$0xff]
        %v155 = vld [vmem:[%s142 + $0x50] sm:$0xff]
        %v156 = vld [vmem:[%s142 + $0x58] sm:$0xff]
        %v157 = vld [vmem:[%s142 + $0x60] sm:$0xff]
        %v158 = vld [vmem:[%s142 + $0x68] sm:$0xff]
        %v159 = vld [vmem:[%s142 + $0x70] sm:$0xff]
        %v160 = vld [vmem:[%s142 + $0x78] sm:$0xff]
        %v161 = vld [vmem:[%s142 + $0x80] sm:$0xff]
        %v162 = vld [vmem:[%s142 + $0x88] sm:$0xff]
        %v163 = vld [vmem:[%s142 + $0x90] sm:$0xff]
        %v164 = vld [vmem:[%s142 + $0x98] sm:$0xff]
        %v165 = vld [vmem:[%s142 + $0xa0] sm:$0xff]
        %v166 = vld [vmem:[%s142 + $0xa8] sm:$0xff]
        %v167 = vld [vmem:[%s142 + $0xb0] sm:$0xff]
        %v168 = vld [vmem:[%s142 + $0xb8] sm:$0xff]
        %v169 = vld [vmem:[%s142 + $0xc0] sm:$0xff]
        %v170 = vld [vmem:[%s142 + $0xc8] sm:$0xff]
        %v171 = vld [vmem:[%s142 + $0xd0] sm:$0xff]
        %v172 = vld [vmem:[%s142 + $0xd8] sm:$0xff]
        %v173 = vld [vmem:[%s142 + $0xe0] sm:$0xff]
        %v174 = vld [vmem:[%s142 + $0xe8] sm:$0xff]
        %v175 = vld [vmem:[%s142 + $0xf0] sm:$0xff]
        %v176 = vld [vmem:[%s142 + $0xf8] sm:$0xff]
        %v177 = vld [vmem:[%s142 + $0x100] sm:$0xff]
        %v178 = vld [vmem:[%s142 + $0x108] sm:$0xff]
        %v179 = vld [vmem:[%s142 + $0x110] sm:$0xff]
        %v180 = vld [vmem:[%s142 + $0x118] sm:$0xff]
        %v181 = vld [vmem:[%s142 + $0x120] sm:$0xff]
        %v182 = vld [vmem:[%s142 + $0x128] sm:$0xff]
        %v183 = vld [vmem:[%s142 + $0x130] sm:$0xff]
        %v184 = vld [vmem:[%s142 + $0x138] sm:$0xff]
        %v185 = vld [vmem:[%s142 + $0x140] sm:$0xff]
        %v186 = vld [vmem:[%s142 + $0x148] sm:$0xff]
        %v187 = vld [vmem:[%s142 + $0x150] sm:$0xff]
        %v188 = vld [vmem:[%s142 + $0x158] sm:$0xff]
        %v189 = vld [vmem:[%s142 + $0x160] sm:$0xff]
        %v190 = vld [vmem:[%s142 + $0x168] sm:$0xff]
        %v191 = vld [vmem:[%s142 + $0x170] sm:$0xff]
        %v192 = vld [vmem:[%s142 + $0x178] sm:$0xff]
        %v193 = vld [vmem:[%s142 + $0x180] sm:$0xff]
        %v194 = vld [vmem:[%s142 + $0x188] sm:$0xff]
        %v195 = vld [vmem:[%s142 + $0x190] sm:$0xff]
        %v196 = vld [vmem:[%s142 + $0x198] sm:$0xff]
        %v197 = vld [vmem:[%s142 + $0x1a0] sm:$0xff]
        %v198 = vld [vmem:[%s142 + $0x1a8] sm:$0xff]
        %v199 = vld [vmem:[%s142 + $0x1b0] sm:$0xff]
        %v200 = vld [vmem:[%s142 + $0x1b8] sm:$0xff]
        %v201 = vld [vmem:[%s142 + $0x1c0] sm:$0xff]
        %v202 = vld [vmem:[%s142 + $0x1c8] sm:$0xff]
        %v203 = vld [vmem:[%s142 + $0x1d0] sm:$0xff]
        %v204 = vld [vmem:[%s142 + $0x1d8] sm:$0xff]
        %v205 = vld [vmem:[%s142 + $0x1e0] sm:$0xff]
        %v206 = vld [vmem:[%s142 + $0x1e8] sm:$0xff]
        %v207 = vld [vmem:[%s142 + $0x1f0] sm:$0xff]
        %v208 = vld [vmem:[%s142 + $0x1f8] sm:$0xff]
        %v209 = vld [vmem:[%s1] sm:$0x1]
        %v210 = vld [vmem:[%s1 + $0x1] sm:$0x1]
        %v211 = vld [vmem:[%s1 + $0x2] sm:$0x1]
        %213 = vset.pattern.permute.xlu0 0
        %214 = vperm.xlu0 %213, %v145
        %v215 = vpop.permute.xlu0 %214
        %218 = vset.pattern.permute.xlu0 0
        %219 = vperm.xlu0 %218, %v146
        %v220 = vpop.permute.xlu0 %219
        %223 = vset.pattern.permute.xlu0 0
        %224 = vperm.xlu0 %223, %v147
        %v225 = vpop.permute.xlu0 %224
        %228 = vset.pattern.permute.xlu0 0
        %229 = vperm.xlu0 %228, %v148
        %v230 = vpop.permute.xlu0 %229
        %233 = vset.pattern.permute.xlu0 0
        %234 = vperm.xlu0 %233, %v149
        %v235 = vpop.permute.xlu0 %234
        %238 = vset.pattern.permute.xlu0 0
        %239 = vperm.xlu0 %238, %v150
        %v240 = vpop.permute.xlu0 %239
        %243 = vset.pattern.permute.xlu0 0
        %244 = vperm.xlu0 %243, %v151
        %v245 = vpop.permute.xlu0 %244
        %248 = vset.pattern.permute.xlu0 0
        %249 = vperm.xlu0 %248, %v152
        %v250 = vpop.permute.xlu0 %249
        %253 = vset.pattern.permute.xlu0 0
        %254 = vperm.xlu0 %253, %v153
        %v255 = vpop.permute.xlu0 %254
        %258 = vset.pattern.permute.xlu0 0
        %259 = vperm.xlu0 %258, %v154
        %v260 = vpop.permute.xlu0 %259
        %263 = vset.pattern.permute.xlu0 0
        %264 = vperm.xlu0 %263, %v155
        %v265 = vpop.permute.xlu0 %264
        %268 = vset.pattern.permute.xlu0 0
        %269 = vperm.xlu0 %268, %v156
        %v270 = vpop.permute.xlu0 %269
        %273 = vset.pattern.permute.xlu0 0
        %274 = vperm.xlu0 %273, %v157
        %v275 = vpop.permute.xlu0 %274
        %278 = vset.pattern.permute.xlu0 0
        %279 = vperm.xlu0 %278, %v158
        %v280 = vpop.permute.xlu0 %279
        %283 = vset.pattern.permute.xlu0 0
        %284 = vperm.xlu0 %283, %v159
        %v285 = vpop.permute.xlu0 %284
        %288 = vset.pattern.permute.xlu0 0
        %289 = vperm.xlu0 %288, %v160
        %v290 = vpop.permute.xlu0 %289
        %293 = vset.pattern.permute.xlu0 0
        %294 = vperm.xlu0 %293, %v161
        %v295 = vpop.permute.xlu0 %294
        %298 = vset.pattern.permute.xlu0 0
        %299 = vperm.xlu0 %298, %v162
        %v300 = vpop.permute.xlu0 %299
        %303 = vset.pattern.permute.xlu0 0
        %304 = vperm.xlu0 %303, %v163
        %v305 = vpop.permute.xlu0 %304
        %308 = vset.pattern.permute.xlu0 0
        %309 = vperm.xlu0 %308, %v164
        %v310 = vpop.permute.xlu0 %309
        %313 = vset.pattern.permute.xlu0 0
        %314 = vperm.xlu0 %313, %v165
        %v315 = vpop.permute.xlu0 %314
        %318 = vset.pattern.permute.xlu0 0
        %319 = vperm.xlu0 %318, %v166
        %v320 = vpop.permute.xlu0 %319
        %323 = vset.pattern.permute.xlu0 0
        %324 = vperm.xlu0 %323, %v167
        %v325 = vpop.permute.xlu0 %324
        %328 = vset.pattern.permute.xlu0 0
        %329 = vperm.xlu0 %328, %v168
        %v330 = vpop.permute.xlu0 %329
        %333 = vset.pattern.permute.xlu0 0
        %334 = vperm.xlu0 %333, %v169
        %v335 = vpop.permute.xlu0 %334
        %338 = vset.pattern.permute.xlu0 0
        %339 = vperm.xlu0 %338, %v170
        %v340 = vpop.permute.xlu0 %339
        %343 = vset.pattern.permute.xlu0 0
        %344 = vperm.xlu0 %343, %v171
        %v345 = vpop.permute.xlu0 %344
        %348 = vset.pattern.permute.xlu0 0
        %349 = vperm.xlu0 %348, %v172
        %v350 = vpop.permute.xlu0 %349
        %353 = vset.pattern.permute.xlu0 0
        %354 = vperm.xlu0 %353, %v173
        %v355 = vpop.permute.xlu0 %354
        %358 = vset.pattern.permute.xlu0 0
        %359 = vperm.xlu0 %358, %v174
        %v360 = vpop.permute.xlu0 %359
        %363 = vset.pattern.permute.xlu0 0
        %364 = vperm.xlu0 %363, %v175
        %v365 = vpop.permute.xlu0 %364
        %368 = vset.pattern.permute.xlu0 0
        %369 = vperm.xlu0 %368, %v176
        %v370 = vpop.permute.xlu0 %369
        %373 = vset.pattern.permute.xlu0 0
        %374 = vperm.xlu0 %373, %v177
        %v375 = vpop.permute.xlu0 %374
        %378 = vset.pattern.permute.xlu0 0
        %379 = vperm.xlu0 %378, %v178
        %v380 = vpop.permute.xlu0 %379
        %383 = vset.pattern.permute.xlu0 0
        %384 = vperm.xlu0 %383, %v179
        %v385 = vpop.permute.xlu0 %384
        %388 = vset.pattern.permute.xlu0 0
        %389 = vperm.xlu0 %388, %v180
        %v390 = vpop.permute.xlu0 %389
        %393 = vset.pattern.permute.xlu0 0
        %394 = vperm.xlu0 %393, %v181
        %v395 = vpop.permute.xlu0 %394
        %398 = vset.pattern.permute.xlu0 0
        %399 = vperm.xlu0 %398, %v182
        %v400 = vpop.permute.xlu0 %399
        %403 = vset.pattern.permute.xlu0 0
        %404 = vperm.xlu0 %403, %v183
        %v405 = vpop.permute.xlu0 %404
        %408 = vset.pattern.permute.xlu0 0
        %409 = vperm.xlu0 %408, %v184
        %v410 = vpop.permute.xlu0 %409
        %413 = vset.pattern.permute.xlu0 0
        %414 = vperm.xlu0 %413, %v185
        %v415 = vpop.permute.xlu0 %414
        %418 = vset.pattern.permute.xlu0 0
        %419 = vperm.xlu0 %418, %v186
        %v420 = vpop.permute.xlu0 %419
        %423 = vset.pattern.permute.xlu0 0
        %424 = vperm.xlu0 %423, %v187
        %v425 = vpop.permute.xlu0 %424
        %428 = vset.pattern.permute.xlu0 0
        %429 = vperm.xlu0 %428, %v188
        %v430 = vpop.permute.xlu0 %429
        %433 = vset.pattern.permute.xlu0 0
        %434 = vperm.xlu0 %433, %v189
        %v435 = vpop.permute.xlu0 %434
        %438 = vset.pattern.permute.xlu0 0
        %439 = vperm.xlu0 %438, %v190
        %v440 = vpop.permute.xlu0 %439
        %443 = vset.pattern.permute.xlu0 0
        %444 = vperm.xlu0 %443, %v191
        %v445 = vpop.permute.xlu0 %444
        %448 = vset.pattern.permute.xlu0 0
        %449 = vperm.xlu0 %448, %v192
        %v450 = vpop.permute.xlu0 %449
        %453 = vset.pattern.permute.xlu0 0
        %454 = vperm.xlu0 %453, %v193
        %v455 = vpop.permute.xlu0 %454
        %458 = vset.pattern.permute.xlu0 0
        %459 = vperm.xlu0 %458, %v194
        %v460 = vpop.permute.xlu0 %459
        %463 = vset.pattern.permute.xlu0 0
        %464 = vperm.xlu0 %463, %v195
        %v465 = vpop.permute.xlu0 %464
        %468 = vset.pattern.permute.xlu0 0
        %469 = vperm.xlu0 %468, %v196
        %v470 = vpop.permute.xlu0 %469
        %473 = vset.pattern.permute.xlu0 0
        %474 = vperm.xlu0 %473, %v197
        %v475 = vpop.permute.xlu0 %474
        %478 = vset.pattern.permute.xlu0 0
        %479 = vperm.xlu0 %478, %v198
        %v480 = vpop.permute.xlu0 %479
        %483 = vset.pattern.permute.xlu0 0
        %484 = vperm.xlu0 %483, %v199
        %v485 = vpop.permute.xlu0 %484
        %488 = vset.pattern.permute.xlu0 0
        %489 = vperm.xlu0 %488, %v200
        %v490 = vpop.permute.xlu0 %489
        %493 = vset.pattern.permute.xlu0 0
        %494 = vperm.xlu0 %493, %v201
        %v495 = vpop.permute.xlu0 %494
        %498 = vset.pattern.permute.xlu0 0
        %499 = vperm.xlu0 %498, %v202
        %v500 = vpop.permute.xlu0 %499
        %503 = vset.pattern.permute.xlu0 0
        %504 = vperm.xlu0 %503, %v203
        %v505 = vpop.permute.xlu0 %504
        %508 = vset.pattern.permute.xlu0 0
        %509 = vperm.xlu0 %508, %v204
        %v510 = vpop.permute.xlu0 %509
        %513 = vset.pattern.permute.xlu0 0
        %514 = vperm.xlu0 %513, %v205
        %v515 = vpop.permute.xlu0 %514
        %518 = vset.pattern.permute.xlu0 0
        %519 = vperm.xlu0 %518, %v206
        %v520 = vpop.permute.xlu0 %519
        %523 = vset.pattern.permute.xlu0 0
        %524 = vperm.xlu0 %523, %v207
        %v525 = vpop.permute.xlu0 %524
        %528 = vset.pattern.permute.xlu0 0
        %529 = vperm.xlu0 %528, %v208
        %v530 = vpop.permute.xlu0 %529
        %v532 = vlaneseq
        %v533 = vshrl.u32 %v532, 7
        %v534 = vsub.s32 0, %v533
        %v535 = vrot.slane %v209, %v534
        %v536 = vmul.f32 %v215, %v535
        %v537 = vmul.f32 %v220, %v535
        %v538 = vmul.f32 %v225, %v535
        %v539 = vmul.f32 %v230, %v535
        %v540 = vmul.f32 %v235, %v535
        %v541 = vmul.f32 %v240, %v535
        %v542 = vmul.f32 %v245, %v535
        %v543 = vmul.f32 %v250, %v535
        %v544 = vmul.f32 %v255, %v535
        %v545 = vmul.f32 %v260, %v535
        %v546 = vmul.f32 %v265, %v535
        %v547 = vmul.f32 %v270, %v535
        %v548 = vmul.f32 %v275, %v535
        %v549 = vmul.f32 %v280, %v535
        %v550 = vmul.f32 %v285, %v535
        %v551 = vmul.f32 %v290, %v535
        %v552 = vmul.f32 %v295, %v535
        %v553 = vmul.f32 %v300, %v535
        %v554 = vmul.f32 %v305, %v535
        %v555 = vmul.f32 %v310, %v535
        %v556 = vmul.f32 %v315, %v535
        %v557 = vmul.f32 %v320, %v535
        %v558 = vmul.f32 %v325, %v535
        %v559 = vmul.f32 %v330, %v535
        %v560 = vmul.f32 %v335, %v535
        %v561 = vmul.f32 %v340, %v535
        %v562 = vmul.f32 %v345, %v535
        %v563 = vmul.f32 %v350, %v535
        %v564 = vmul.f32 %v355, %v535
        %v565 = vmul.f32 %v360, %v535
        %v566 = vmul.f32 %v365, %v535
        %v567 = vmul.f32 %v370, %v535
        %v568 = vmul.f32 %v375, %v535
        %v569 = vmul.f32 %v380, %v535
        %v570 = vmul.f32 %v385, %v535
        %v571 = vmul.f32 %v390, %v535
        %v572 = vmul.f32 %v395, %v535
        %v573 = vmul.f32 %v400, %v535
        %v574 = vmul.f32 %v405, %v535
        %v575 = vmul.f32 %v410, %v535
        %v576 = vmul.f32 %v415, %v535
        %v577 = vmul.f32 %v420, %v535
        %v578 = vmul.f32 %v425, %v535
        %v579 = vmul.f32 %v430, %v535
        %v580 = vmul.f32 %v435, %v535
        %v581 = vmul.f32 %v440, %v535
        %v582 = vmul.f32 %v445, %v535
        %v583 = vmul.f32 %v450, %v535
        %v584 = vmul.f32 %v455, %v535
        %v585 = vmul.f32 %v460, %v535
        %v586 = vmul.f32 %v465, %v535
        %v587 = vmul.f32 %v470, %v535
        %v588 = vmul.f32 %v475, %v535
        %v589 = vmul.f32 %v480, %v535
        %v590 = vmul.f32 %v485, %v535
        %v591 = vmul.f32 %v490, %v535
        %v592 = vmul.f32 %v495, %v535
        %v593 = vmul.f32 %v500, %v535
        %v594 = vmul.f32 %v505, %v535
        %v595 = vmul.f32 %v510, %v535
        %v596 = vmul.f32 %v515, %v535
        %v597 = vmul.f32 %v520, %v535
        %v598 = vmul.f32 %v525, %v535
        %v599 = vmul.f32 %v530, %v535
        %600 = vset.pattern.permute.xlu0 1
        %601 = vperm.xlu0 %600, %v145
        %v602 = vpop.permute.xlu0 %601
        %604 = vset.pattern.permute.xlu0 1
        %605 = vperm.xlu0 %604, %v146
        %v606 = vpop.permute.xlu0 %605
        %608 = vset.pattern.permute.xlu0 1
        %609 = vperm.xlu0 %608, %v147
        %v610 = vpop.permute.xlu0 %609
        %612 = vset.pattern.permute.xlu0 1
        %613 = vperm.xlu0 %612, %v148
        %v614 = vpop.permute.xlu0 %613
        %616 = vset.pattern.permute.xlu0 1
        %617 = vperm.xlu0 %616, %v149
        %v618 = vpop.permute.xlu0 %617
        %620 = vset.pattern.permute.xlu0 1
        %621 = vperm.xlu0 %620, %v150
        %v622 = vpop.permute.xlu0 %621
        %624 = vset.pattern.permute.xlu0 1
        %625 = vperm.xlu0 %624, %v151
        %v626 = vpop.permute.xlu0 %625
        %628 = vset.pattern.permute.xlu0 1
        %629 = vperm.xlu0 %628, %v152
        %v630 = vpop.permute.xlu0 %629
        %632 = vset.pattern.permute.xlu0 1
        %633 = vperm.xlu0 %632, %v153
        %v634 = vpop.permute.xlu0 %633
        %636 = vset.pattern.permute.xlu0 1
        %637 = vperm.xlu0 %636, %v154
        %v638 = vpop.permute.xlu0 %637
        %640 = vset.pattern.permute.xlu0 1
        %641 = vperm.xlu0 %640, %v155
        %v642 = vpop.permute.xlu0 %641
        %644 = vset.pattern.permute.xlu0 1
        %645 = vperm.xlu0 %644, %v156
        %v646 = vpop.permute.xlu0 %645
        %648 = vset.pattern.permute.xlu0 1
        %649 = vperm.xlu0 %648, %v157
        %v650 = vpop.permute.xlu0 %649
        %652 = vset.pattern.permute.xlu0 1
        %653 = vperm.xlu0 %652, %v158
        %v654 = vpop.permute.xlu0 %653
        %656 = vset.pattern.permute.xlu0 1
        %657 = vperm.xlu0 %656, %v159
        %v658 = vpop.permute.xlu0 %657
        %660 = vset.pattern.permute.xlu0 1
        %661 = vperm.xlu0 %660, %v160
        %v662 = vpop.permute.xlu0 %661
        %664 = vset.pattern.permute.xlu0 1
        %665 = vperm.xlu0 %664, %v161
        %v666 = vpop.permute.xlu0 %665
        %668 = vset.pattern.permute.xlu0 1
        %669 = vperm.xlu0 %668, %v162
        %v670 = vpop.permute.xlu0 %669
        %672 = vset.pattern.permute.xlu0 1
        %673 = vperm.xlu0 %672, %v163
        %v674 = vpop.permute.xlu0 %673
        %676 = vset.pattern.permute.xlu0 1
        %677 = vperm.xlu0 %676, %v164
        %v678 = vpop.permute.xlu0 %677
        %680 = vset.pattern.permute.xlu0 1
        %681 = vperm.xlu0 %680, %v165
        %v682 = vpop.permute.xlu0 %681
        %684 = vset.pattern.permute.xlu0 1
        %685 = vperm.xlu0 %684, %v166
        %v686 = vpop.permute.xlu0 %685
        %688 = vset.pattern.permute.xlu0 1
        %689 = vperm.xlu0 %688, %v167
        %v690 = vpop.permute.xlu0 %689
        %692 = vset.pattern.permute.xlu0 1
        %693 = vperm.xlu0 %692, %v168
        %v694 = vpop.permute.xlu0 %693
        %696 = vset.pattern.permute.xlu0 1
        %697 = vperm.xlu0 %696, %v169
        %v698 = vpop.permute.xlu0 %697
        %700 = vset.pattern.permute.xlu0 1
        %701 = vperm.xlu0 %700, %v170
        %v702 = vpop.permute.xlu0 %701
        %704 = vset.pattern.permute.xlu0 1
        %705 = vperm.xlu0 %704, %v171
        %v706 = vpop.permute.xlu0 %705
        %708 = vset.pattern.permute.xlu0 1
        %709 = vperm.xlu0 %708, %v172
        %v710 = vpop.permute.xlu0 %709
        %712 = vset.pattern.permute.xlu0 1
        %713 = vperm.xlu0 %712, %v173
        %v714 = vpop.permute.xlu0 %713
        %716 = vset.pattern.permute.xlu0 1
        %717 = vperm.xlu0 %716, %v174
        %v718 = vpop.permute.xlu0 %717
        %720 = vset.pattern.permute.xlu0 1
        %721 = vperm.xlu0 %720, %v175
        %v722 = vpop.permute.xlu0 %721
        %724 = vset.pattern.permute.xlu0 1
        %725 = vperm.xlu0 %724, %v176
        %v726 = vpop.permute.xlu0 %725
        %728 = vset.pattern.permute.xlu0 1
        %729 = vperm.xlu0 %728, %v177
        %v730 = vpop.permute.xlu0 %729
        %732 = vset.pattern.permute.xlu0 1
        %733 = vperm.xlu0 %732, %v178
        %v734 = vpop.permute.xlu0 %733
        %736 = vset.pattern.permute.xlu0 1
        %737 = vperm.xlu0 %736, %v179
        %v738 = vpop.permute.xlu0 %737
        %740 = vset.pattern.permute.xlu0 1
        %741 = vperm.xlu0 %740, %v180
        %v742 = vpop.permute.xlu0 %741
        %744 = vset.pattern.permute.xlu0 1
        %745 = vperm.xlu0 %744, %v181
        %v746 = vpop.permute.xlu0 %745
        %748 = vset.pattern.permute.xlu0 1
        %749 = vperm.xlu0 %748, %v182
        %v750 = vpop.permute.xlu0 %749
        %752 = vset.pattern.permute.xlu0 1
        %753 = vperm.xlu0 %752, %v183
        %v754 = vpop.permute.xlu0 %753
        %756 = vset.pattern.permute.xlu0 1
        %757 = vperm.xlu0 %756, %v184
        %v758 = vpop.permute.xlu0 %757
        %760 = vset.pattern.permute.xlu0 1
        %761 = vperm.xlu0 %760, %v185
        %v762 = vpop.permute.xlu0 %761
        %764 = vset.pattern.permute.xlu0 1
        %765 = vperm.xlu0 %764, %v186
        %v766 = vpop.permute.xlu0 %765
        %768 = vset.pattern.permute.xlu0 1
        %769 = vperm.xlu0 %768, %v187
        %v770 = vpop.permute.xlu0 %769
        %772 = vset.pattern.permute.xlu0 1
        %773 = vperm.xlu0 %772, %v188
        %v774 = vpop.permute.xlu0 %773
        %776 = vset.pattern.permute.xlu0 1
        %777 = vperm.xlu0 %776, %v189
        %v778 = vpop.permute.xlu0 %777
        %780 = vset.pattern.permute.xlu0 1
        %781 = vperm.xlu0 %780, %v190
        %v782 = vpop.permute.xlu0 %781
        %784 = vset.pattern.permute.xlu0 1
        %785 = vperm.xlu0 %784, %v191
        %v786 = vpop.permute.xlu0 %785
        %788 = vset.pattern.permute.xlu0 1
        %789 = vperm.xlu0 %788, %v192
        %v790 = vpop.permute.xlu0 %789
        %792 = vset.pattern.permute.xlu0 1
        %793 = vperm.xlu0 %792, %v193
        %v794 = vpop.permute.xlu0 %793
        %796 = vset.pattern.permute.xlu0 1
        %797 = vperm.xlu0 %796, %v194
        %v798 = vpop.permute.xlu0 %797
        %800 = vset.pattern.permute.xlu0 1
        %801 = vperm.xlu0 %800, %v195
        %v802 = vpop.permute.xlu0 %801
        %804 = vset.pattern.permute.xlu0 1
        %805 = vperm.xlu0 %804, %v196
        %v806 = vpop.permute.xlu0 %805
        %808 = vset.pattern.permute.xlu0 1
        %809 = vperm.xlu0 %808, %v197
        %v810 = vpop.permute.xlu0 %809
        %812 = vset.pattern.permute.xlu0 1
        %813 = vperm.xlu0 %812, %v198
        %v814 = vpop.permute.xlu0 %813
        %816 = vset.pattern.permute.xlu0 1
        %817 = vperm.xlu0 %816, %v199
        %v818 = vpop.permute.xlu0 %817
        %820 = vset.pattern.permute.xlu0 1
        %821 = vperm.xlu0 %820, %v200
        %v822 = vpop.permute.xlu0 %821
        %824 = vset.pattern.permute.xlu0 1
        %825 = vperm.xlu0 %824, %v201
        %v826 = vpop.permute.xlu0 %825
        %828 = vset.pattern.permute.xlu0 1
        %829 = vperm.xlu0 %828, %v202
        %v830 = vpop.permute.xlu0 %829
        %832 = vset.pattern.permute.xlu0 1
        %833 = vperm.xlu0 %832, %v203
        %v834 = vpop.permute.xlu0 %833
        %836 = vset.pattern.permute.xlu0 1
        %837 = vperm.xlu0 %836, %v204
        %v838 = vpop.permute.xlu0 %837
        %840 = vset.pattern.permute.xlu0 1
        %841 = vperm.xlu0 %840, %v205
        %v842 = vpop.permute.xlu0 %841
        %844 = vset.pattern.permute.xlu0 1
        %845 = vperm.xlu0 %844, %v206
        %v846 = vpop.permute.xlu0 %845
        %848 = vset.pattern.permute.xlu0 1
        %849 = vperm.xlu0 %848, %v207
        %v850 = vpop.permute.xlu0 %849
        %852 = vset.pattern.permute.xlu0 1
        %853 = vperm.xlu0 %852, %v208
        %v854 = vpop.permute.xlu0 %853
        %v856 = vlaneseq
        %v857 = vshrl.u32 %v856, 7
        %v858 = vsub.s32 0, %v857
        %v859 = vrot.slane %v210, %v858
        %v860 = vmul.f32 %v602, %v859
        %v861 = vmul.f32 %v606, %v859
        %v862 = vmul.f32 %v610, %v859
        %v863 = vmul.f32 %v614, %v859
        %v864 = vmul.f32 %v618, %v859
        %v865 = vmul.f32 %v622, %v859
        %v866 = vmul.f32 %v626, %v859
        %v867 = vmul.f32 %v630, %v859
        %v868 = vmul.f32 %v634, %v859
        %v869 = vmul.f32 %v638, %v859
        %v870 = vmul.f32 %v642, %v859
        %v871 = vmul.f32 %v646, %v859
        %v872 = vmul.f32 %v650, %v859
        %v873 = vmul.f32 %v654, %v859
        %v874 = vmul.f32 %v658, %v859
        %v875 = vmul.f32 %v662, %v859
        %v876 = vmul.f32 %v666, %v859
        %v877 = vmul.f32 %v670, %v859
        %v878 = vmul.f32 %v674, %v859
        %v879 = vmul.f32 %v678, %v859
        %v880 = vmul.f32 %v682, %v859
        %v881 = vmul.f32 %v686, %v859
        %v882 = vmul.f32 %v690, %v859
        %v883 = vmul.f32 %v694, %v859
        %v884 = vmul.f32 %v698, %v859
        %v885 = vmul.f32 %v702, %v859
        %v886 = vmul.f32 %v706, %v859
        %v887 = vmul.f32 %v710, %v859
        %v888 = vmul.f32 %v714, %v859
        %v889 = vmul.f32 %v718, %v859
        %v890 = vmul.f32 %v722, %v859
        %v891 = vmul.f32 %v726, %v859
        %v892 = vmul.f32 %v730, %v859
        %v893 = vmul.f32 %v734, %v859
        %v894 = vmul.f32 %v738, %v859
        %v895 = vmul.f32 %v742, %v859
        %v896 = vmul.f32 %v746, %v859
        %v897 = vmul.f32 %v750, %v859
        %v898 = vmul.f32 %v754, %v859
        %v899 = vmul.f32 %v758, %v859
        %v900 = vmul.f32 %v762, %v859
        %v901 = vmul.f32 %v766, %v859
        %v902 = vmul.f32 %v770, %v859
        %v903 = vmul.f32 %v774, %v859
        %v904 = vmul.f32 %v778, %v859
        %v905 = vmul.f32 %v782, %v859
        %v906 = vmul.f32 %v786, %v859
        %v907 = vmul.f32 %v790, %v859
        %v908 = vmul.f32 %v794, %v859
        %v909 = vmul.f32 %v798, %v859
        %v910 = vmul.f32 %v802, %v859
        %v911 = vmul.f32 %v806, %v859
        %v912 = vmul.f32 %v810, %v859
        %v913 = vmul.f32 %v814, %v859
        %v914 = vmul.f32 %v818, %v859
        %v915 = vmul.f32 %v822, %v859
        %v916 = vmul.f32 %v826, %v859
        %v917 = vmul.f32 %v830, %v859
        %v918 = vmul.f32 %v834, %v859
        %v919 = vmul.f32 %v838, %v859
        %v920 = vmul.f32 %v842, %v859
        %v921 = vmul.f32 %v846, %v859
        %v922 = vmul.f32 %v850, %v859
        %v923 = vmul.f32 %v854, %v859
        %v924 = vadd.f32 %v536, %v860
        %v925 = vadd.f32 %v537, %v861
        %v926 = vadd.f32 %v538, %v862
        %v927 = vadd.f32 %v539, %v863
        %v928 = vadd.f32 %v540, %v864
        %v929 = vadd.f32 %v541, %v865
        %v930 = vadd.f32 %v542, %v866
        %v931 = vadd.f32 %v543, %v867
        %v932 = vadd.f32 %v544, %v868
        %v933 = vadd.f32 %v545, %v869
        %v934 = vadd.f32 %v546, %v870
        %v935 = vadd.f32 %v547, %v871
        %v936 = vadd.f32 %v548, %v872
        %v937 = vadd.f32 %v549, %v873
        %v938 = vadd.f32 %v550, %v874
        %v939 = vadd.f32 %v551, %v875
        %v940 = vadd.f32 %v552, %v876
        %v941 = vadd.f32 %v553, %v877
        %v942 = vadd.f32 %v554, %v878
        %v943 = vadd.f32 %v555, %v879
        %v944 = vadd.f32 %v556, %v880
        %v945 = vadd.f32 %v557, %v881
        %v946 = vadd.f32 %v558, %v882
        %v947 = vadd.f32 %v559, %v883
        %v948 = vadd.f32 %v560, %v884
        %v949 = vadd.f32 %v561, %v885
        %v950 = vadd.f32 %v562, %v886
        %v951 = vadd.f32 %v563, %v887
        %v952 = vadd.f32 %v564, %v888
        %v953 = vadd.f32 %v565, %v889
        %v954 = vadd.f32 %v566, %v890
        %v955 = vadd.f32 %v567, %v891
        %v956 = vadd.f32 %v568, %v892
        %v957 = vadd.f32 %v569, %v893
        %v958 = vadd.f32 %v570, %v894
        %v959 = vadd.f32 %v571, %v895
        %v960 = vadd.f32 %v572, %v896
        %v961 = vadd.f32 %v573, %v897
        %v962 = vadd.f32 %v574, %v898
        %v963 = vadd.f32 %v575, %v899
        %v964 = vadd.f32 %v576, %v900
        %v965 = vadd.f32 %v577, %v901
        %v966 = vadd.f32 %v578, %v902
        %v967 = vadd.f32 %v579, %v903
        %v968 = vadd.f32 %v580, %v904
        %v969 = vadd.f32 %v581, %v905
        %v970 = vadd.f32 %v582, %v906
        %v971 = vadd.f32 %v583, %v907
        %v972 = vadd.f32 %v584, %v908
        %v973 = vadd.f32 %v585, %v909
        %v974 = vadd.f32 %v586, %v910
        %v975 = vadd.f32 %v587, %v911
        %v976 = vadd.f32 %v588, %v912
        %v977 = vadd.f32 %v589, %v913
        %v978 = vadd.f32 %v590, %v914
        %v979 = vadd.f32 %v591, %v915
        %v980 = vadd.f32 %v592, %v916
        %v981 = vadd.f32 %v593, %v917
        %v982 = vadd.f32 %v594, %v918
        %v983 = vadd.f32 %v595, %v919
        %v984 = vadd.f32 %v596, %v920
        %v985 = vadd.f32 %v597, %v921
        %v986 = vadd.f32 %v598, %v922
        %v987 = vadd.f32 %v599, %v923
        %v988 = vlaneseq
        %v989 = vshrl.u32 %v988, 7
        %v990 = vsub.s32 0, %v989
        %v991 = vrot.slane %v211, %v990
        %v992 = vadd.f32 %v924, %v991
        %v993 = vadd.f32 %v925, %v991
        %v994 = vadd.f32 %v926, %v991
        %v995 = vadd.f32 %v927, %v991
        %v996 = vadd.f32 %v928, %v991
        %v997 = vadd.f32 %v929, %v991
        %v998 = vadd.f32 %v930, %v991
        %v999 = vadd.f32 %v931, %v991
        %v1000 = vadd.f32 %v932, %v991
        %v1001 = vadd.f32 %v933, %v991
        %v1002 = vadd.f32 %v934, %v991
        %v1003 = vadd.f32 %v935, %v991
        %v1004 = vadd.f32 %v936, %v991
        %v1005 = vadd.f32 %v937, %v991
        %v1006 = vadd.f32 %v938, %v991
        %v1007 = vadd.f32 %v939, %v991
        %v1008 = vadd.f32 %v940, %v991
        %v1009 = vadd.f32 %v941, %v991
        %v1010 = vadd.f32 %v942, %v991
        %v1011 = vadd.f32 %v943, %v991
        %v1012 = vadd.f32 %v944, %v991
        %v1013 = vadd.f32 %v945, %v991
        %v1014 = vadd.f32 %v946, %v991
        %v1015 = vadd.f32 %v947, %v991
        %v1016 = vadd.f32 %v948, %v991
        %v1017 = vadd.f32 %v949, %v991
        %v1018 = vadd.f32 %v950, %v991
        %v1019 = vadd.f32 %v951, %v991
        %v1020 = vadd.f32 %v952, %v991
        %v1021 = vadd.f32 %v953, %v991
        %v1022 = vadd.f32 %v954, %v991
        %v1023 = vadd.f32 %v955, %v991
        %v1024 = vadd.f32 %v956, %v991
        %v1025 = vadd.f32 %v957, %v991
        %v1026 = vadd.f32 %v958, %v991
        %v1027 = vadd.f32 %v959, %v991
        %v1028 = vadd.f32 %v960, %v991
        %v1029 = vadd.f32 %v961, %v991
        %v1030 = vadd.f32 %v962, %v991
        %v1031 = vadd.f32 %v963, %v991
        %v1032 = vadd.f32 %v964, %v991
        %v1033 = vadd.f32 %v965, %v991
        %v1034 = vadd.f32 %v966, %v991
        %v1035 = vadd.f32 %v967, %v991
        %v1036 = vadd.f32 %v968, %v991
        %v1037 = vadd.f32 %v969, %v991
        %v1038 = vadd.f32 %v970, %v991
        %v1039 = vadd.f32 %v971, %v991
        %v1040 = vadd.f32 %v972, %v991
        %v1041 = vadd.f32 %v973, %v991
        %v1042 = vadd.f32 %v974, %v991
        %v1043 = vadd.f32 %v975, %v991
        %v1044 = vadd.f32 %v976, %v991
        %v1045 = vadd.f32 %v977, %v991
        %v1046 = vadd.f32 %v978, %v991
        %v1047 = vadd.f32 %v979, %v991
        %v1048 = vadd.f32 %v980, %v991
        %v1049 = vadd.f32 %v981, %v991
        %v1050 = vadd.f32 %v982, %v991
        %v1051 = vadd.f32 %v983, %v991
        %v1052 = vadd.f32 %v984, %v991
        %v1053 = vadd.f32 %v985, %v991
        %v1054 = vadd.f32 %v986, %v991
        %v1055 = vadd.f32 %v987, %v991
        %1056 = vst [vmem:[%s137] sm:$0xff] %v992
        %1057 = vst [vmem:[%s137 + $0x8] sm:$0xff] %v993
        %1058 = vst [vmem:[%s137 + $0x10] sm:$0xff] %v994
        %1059 = vst [vmem:[%s137 + $0x18] sm:$0xff] %v995
        %1060 = vst [vmem:[%s137 + $0x20] sm:$0xff] %v996
        %1061 = vst [vmem:[%s137 + $0x28] sm:$0xff] %v997
        %1062 = vst [vmem:[%s137 + $0x30] sm:$0xff] %v998
        %1063 = vst [vmem:[%s137 + $0x38] sm:$0xff] %v999
        %1064 = vst [vmem:[%s137 + $0x40] sm:$0xff] %v1000
        %1065 = vst [vmem:[%s137 + $0x48] sm:$0xff] %v1001
        %1066 = vst [vmem:[%s137 + $0x50] sm:$0xff] %v1002
        %1067 = vst [vmem:[%s137 + $0x58] sm:$0xff] %v1003
        %1068 = vst [vmem:[%s137 + $0x60] sm:$0xff] %v1004
        %1069 = vst [vmem:[%s137 + $0x68] sm:$0xff] %v1005
        %1070 = vst [vmem:[%s137 + $0x70] sm:$0xff] %v1006
        %1071 = vst [vmem:[%s137 + $0x78] sm:$0xff] %v1007
        %1072 = vst [vmem:[%s137 + $0x80] sm:$0xff] %v1008
        %1073 = vst [vmem:[%s137 + $0x88] sm:$0xff] %v1009
        %1074 = vst [vmem:[%s137 + $0x90] sm:$0xff] %v1010
        %1075 = vst [vmem:[%s137 + $0x98] sm:$0xff] %v1011
        %1076 = vst [vmem:[%s137 + $0xa0] sm:$0xff] %v1012
        %1077 = vst [vmem:[%s137 + $0xa8] sm:$0xff] %v1013
        %1078 = vst [vmem:[%s137 + $0xb0] sm:$0xff] %v1014
        %1079 = vst [vmem:[%s137 + $0xb8] sm:$0xff] %v1015
        %1080 = vst [vmem:[%s137 + $0xc0] sm:$0xff] %v1016
        %1081 = vst [vmem:[%s137 + $0xc8] sm:$0xff] %v1017
        %1082 = vst [vmem:[%s137 + $0xd0] sm:$0xff] %v1018
        %1083 = vst [vmem:[%s137 + $0xd8] sm:$0xff] %v1019
        %1084 = vst [vmem:[%s137 + $0xe0] sm:$0xff] %v1020
        %1085 = vst [vmem:[%s137 + $0xe8] sm:$0xff] %v1021
        %1086 = vst [vmem:[%s137 + $0xf0] sm:$0xff] %v1022
        %1087 = vst [vmem:[%s137 + $0xf8] sm:$0xff] %v1023
        %1088 = vst [vmem:[%s137 + $0x100] sm:$0xff] %v1024
        %1089 = vst [vmem:[%s137 + $0x108] sm:$0xff] %v1025
        %1090 = vst [vmem:[%s137 + $0x110] sm:$0xff] %v1026
        %1091 = vst [vmem:[%s137 + $0x118] sm:$0xff] %v1027
        %1092 = vst [vmem:[%s137 + $0x120] sm:$0xff] %v1028
        %1093 = vst [vmem:[%s137 + $0x128] sm:$0xff] %v1029
        %1094 = vst [vmem:[%s137 + $0x130] sm:$0xff] %v1030
        %1095 = vst [vmem:[%s137 + $0x138] sm:$0xff] %v1031
        %1096 = vst [vmem:[%s137 + $0x140] sm:$0xff] %v1032
        %1097 = vst [vmem:[%s137 + $0x148] sm:$0xff] %v1033
        %1098 = vst [vmem:[%s137 + $0x150] sm:$0xff] %v1034
        %1099 = vst [vmem:[%s137 + $0x158] sm:$0xff] %v1035
        %1100 = vst [vmem:[%s137 + $0x160] sm:$0xff] %v1036
        %1101 = vst [vmem:[%s137 + $0x168] sm:$0xff] %v1037
        %1102 = vst [vmem:[%s137 + $0x170] sm:$0xff] %v1038
        %1103 = vst [vmem:[%s137 + $0x178] sm:$0xff] %v1039
        %1104 = vst [vmem:[%s137 + $0x180] sm:$0xff] %v1040
        %1105 = vst [vmem:[%s137 + $0x188] sm:$0xff] %v1041
        %1106 = vst [vmem:[%s137 + $0x190] sm:$0xff] %v1042
        %1107 = vst [vmem:[%s137 + $0x198] sm:$0xff] %v1043
        %1108 = vst [vmem:[%s137 + $0x1a0] sm:$0xff] %v1044
        %1109 = vst [vmem:[%s137 + $0x1a8] sm:$0xff] %v1045
        %1110 = vst [vmem:[%s137 + $0x1b0] sm:$0xff] %v1046
        %1111 = vst [vmem:[%s137 + $0x1b8] sm:$0xff] %v1047
        %1112 = vst [vmem:[%s137 + $0x1c0] sm:$0xff] %v1048
        %1113 = vst [vmem:[%s137 + $0x1c8] sm:$0xff] %v1049
        %1114 = vst [vmem:[%s137 + $0x1d0] sm:$0xff] %v1050
        %1115 = vst [vmem:[%s137 + $0x1d8] sm:$0xff] %v1051
        %1116 = vst [vmem:[%s137 + $0x1e0] sm:$0xff] %v1052
        %1117 = vst [vmem:[%s137 + $0x1e8] sm:$0xff] %v1053
        %1118 = vst [vmem:[%s137 + $0x1f0] sm:$0xff] %v1054
        %1119 = vst [vmem:[%s137 + $0x1f8] sm:$0xff] %v1055
        %s1120 = sand.u32 %s71, 1
        %s1121 = scalar_lea.sflag [#allocation3], %s1120
        %s1122 = sand.u32 %s71, 1
        %s1123 = smul.addr %s1122, 512
        %s1124 = scalar_lea.vmem [#allocation2], %s1123
        // Predicated region
        $region29: #{_lambda_.1} parent=27 // pred_check
          %p1125 = pneg %p81
        $region30: #{_lambda_.1} parent=27 // pred_check_branch
          %1127 = sbr.rel (%p1125) target = $region32
        $region31: #{_lambda_.1} parent=27 // pred_region
          %s1128 = smul.u32 64, %s16
          %s1130 = ssub.s32 8192, 8192
          %1131 = vsyncadd %s1121, %s1130
          %s1132 = smul.addr %s1128, 128
          %s1133 = scalar_lea.hbm %s2, %s1132
          %s1134 = sshll.u32 %s1124, 4
          %s1135 = int_to_ptr.vmem [resolvable:$true] %s1134
          %1140 = dma.vmem_to_hbm [thread:$0]  %s1135, 8192, %s1133, %s1121, 128, 128, 8
        $region32: #{_lambda_.1} parent=27 // pred_fallthru
          _
      $region28: #{_lambda_.1} parent=5 // pred_fallthru
        _
      %p1141 = scmp.le.s32.totalorder 2, %s11
      // Predicated region
      $region33: #{_lambda_.1} parent=5 // pred_check
        %p1142 = pneg %p1141
      $region34: #{_lambda_.1} parent=5 // pred_check_branch
        %1144 = sbr.rel (%p1142) target = $region36
      $region35: #{_lambda_.1} parent=5 // pred_region
        %s1145 = ssub.s32 %s11, 2
        // Predicated region
        $region37: #{_lambda_.1} parent=35 // pred_check
          %p1146 = pneg %p87
        $region38: #{_lambda_.1} parent=35 // pred_check_branch
          %1148 = sbr.rel (%p1146) target = $region40
        $region39: #{_lambda_.1} parent=35 // pred_region
          %s1149 = sand.u32 %s72, 1
          %s1150 = scalar_lea.sflag [#allocation3], %s1149
          %s1151 = sand.u32 %s72, 1
          %s1152 = smul.addr %s1151, 512
          %s1153 = scalar_lea.vmem [#allocation2], %s1152
          %1154 = dma.done %s1150, 8192
        $region40: #{_lambda_.1} parent=35 // pred_fallthru
          _
      $region36: #{_lambda_.1} parent=5 // pred_fallthru
        _
    $region6: #{_lambda_.1} parent=1 // loop_footer
      %s15 = sadd.s32 1, %s11
    $region7: #{_lambda_.1} parent=1 // loop_footer_branch
      %10 = sbr.rel target = $region3
    $region8: #{_lambda_.1} parent=1 // loop_exit
      _
    %1155 = vsyncpa [#allocation3], 1
    %s1156 = scalar_lea.sflag [#allocation3], 1
    %1157 = vsyncpa %s1156, 1

</llo_original>
